<compile_context>
chip_gen: v5e
topology: v5e:2x2
jax: 0.10.0
libtpu: 0.0.40
codegen_flags: <defaults>
</compile_context>

<pallas_src>
import functools

import jax
import jax.numpy as jnp
from jax import lax
from jax.experimental import pallas as pl
from jax.experimental.pallas import tpu as pltpu


# tap index k (0..3) -> (phase parity, phase-row/col shift):
#   original coord = 2*o + k - 1 = 2*(o + shift) + parity
_TAP_SPLIT = {0: (1, -1), 1: (0, 0), 2: (1, 0), 3: (0, 1)}


def _downsample2_kernel(xwin_ref, w_ref, b_ref, cm_ref, o_ref, stack_ref, *,
                        W2, S_blk, CP):
    """One (batch, row-block) grid step.

    xwin_ref : (1, 1, 4, CP, Lwin)  halo'd window of the 4 phase slabs
               (flattened R+2 padded phase rows + 1 sentinel lane each side)
    w_ref    : (C_out, 16*CP)       tap-major, channel-padded conv weight
    b_ref    : (C_out, 1)           bias
    cm_ref   : (2, S_blk)           column-edge masks for dx = -1 / +1
    o_ref    : (1, C_out, S_blk)    lane-dense channels-first output block
    stack_ref: (16*CP, S_blk)       VMEM scratch holding all 16 tap slabs
    """
    # Build the stacked-tap MXU operand: one aligned (CP, S_blk) store per tap.
    for ky in range(4):
        pr, dy = _TAP_SPLIT[ky]
        for kx in range(4):
            pc, dx = _TAP_SPLIT[kx]
            tap = ky * 4 + kx
            start = 1 + (1 + dy) * W2 + dx            # static lane offset
            slab = xwin_ref[0, 0, 2 * pr + pc, :, start:start + S_blk]
            if dx == -1:                              # left image edge
                slab = slab * cm_ref[0:1, :]
            elif dx == 1:                             # right image edge
                slab = slab * cm_ref[1:2, :]
            stack_ref[tap * CP:(tap + 1) * CP, :] = slab

    # Single MXU contraction over all 16 taps * CP channels, f32 accumulation.
    acc = jnp.dot(w_ref[...], stack_ref[...], preferred_element_type=jnp.float32)
    o_ref[0, :, :] = (acc + b_ref[...]).astype(o_ref.dtype)


def _pick_block_rows(H2, W2, CP, C_out, itemsize, budget_bytes=10 * 2**20):
    """Largest row-block R (divisor of H2) with lane-aligned, VMEM-friendly blocks."""
    cands = [R for R in range(1, H2 + 1)
             if H2 % R == 0 and (R == H2 or (R * W2) % 128 == 0)]

    def vmem(R):
        S = R * W2
        Lwin = (R + 2) * W2 + 2
        return ((2 * 4 * CP * Lwin + 16 * CP * S) * itemsize  # in (dbl buf) + stack
                + 2 * C_out * S * 4)                          # out (dbl buf)

    good = [R for R in cands if vmem(R) <= budget_bytes and R * W2 <= 4096]
    if not good:
        good = [R for R in cands if vmem(R) <= budget_bytes]
    return max(good) if good else min(cands)


def downsample2_forward(x_nchw, w_oihw, bias, *, compute_dtype=None):
    """Pallas forward of DownSample_2.

    x: (B, C_in, H, W) NCHW, w: (C_out, C_in, 4, 4), bias: (C_out,).
    compute_dtype: in-kernel operand dtype (jnp.bfloat16 recommended on
    v6e/v7x); accumulation is always f32.
    """
    out_dtype = x_nchw.dtype
    cdt = compute_dtype or x_nchw.dtype
    B, C_in, H, W = x_nchw.shape
    C_out = w_oihw.shape[0]
    assert H % 2 == 0 and W % 2 == 0, "even spatial dims expected (stride 2)"
    H2, W2 = H // 2, W // 2
    CP = max(8, -(-C_in // 8) * 8)           # channels padded to 8 sublanes

    x = x_nchw.astype(cdt)

    # 2x2 space-to-depth:  xp[b, 2*pr+pc, c, i, j] = x[b, c, 2i+pr, 2j+pc]
    xp = jnp.transpose(x.reshape(B, C_in, H2, 2, W2, 2),
                       (0, 3, 5, 1, 2, 4)).reshape(B, 4, C_in, H2, W2)
    # pad channels so every in-kernel scratch store is full 8-sublane aligned
    if CP != C_in:
        xp = jnp.pad(xp, ((0, 0), (0, 0), (0, CP - C_in), (0, 0), (0, 0)))
    # zero phase rows above/below the image (the conv's padding=1 along H) and
    # one sentinel lane on each end of the flattened row axis (corner taps).
    xp = jnp.pad(xp, ((0, 0), (0, 0), (0, 0), (1, 1), (0, 0)))
    xp_flat = jnp.pad(xp.reshape(B, 4, CP, (H2 + 2) * W2),
                      ((0, 0), (0, 0), (0, 0), (1, 1)))

    # spatial row blocking with a +-1 phase-row halo baked into each block
    R = _pick_block_rows(H2, W2, CP, C_out, jnp.dtype(cdt).itemsize)
    nR = H2 // R
    S_blk = R * W2
    Lwin = (R + 2) * W2 + 2
    xb = jnp.stack([xp_flat[..., r * S_blk: r * S_blk + Lwin]
                    for r in range(nR)], axis=1)        # (B, nR, 4, CP, Lwin)

    # tap-major channel-padded 2-D weight: w2d[co, tap*CP + ci] = w[co,ci,ky,kx]
    wt = jnp.transpose(w_oihw.astype(jnp.float32),
                       (2, 3, 0, 1)).reshape(16, C_out, C_in)
    wt = jnp.pad(wt, ((0, 0), (0, 0), (0, CP - C_in)))
    w2d = jnp.transpose(wt, (1, 0, 2)).reshape(C_out, 16 * CP).astype(cdt)
    b2 = bias.astype(jnp.float32).reshape(C_out, 1)

    # the only masks left: image left/right column edges (dx = -1 / +1 taps)
    col = jnp.arange(S_blk) % W2
    cmask = jnp.stack([col != 0, col != W2 - 1]).astype(cdt)   # (2, S_blk)

    kernel = functools.partial(_downsample2_kernel, W2=W2, S_blk=S_blk, CP=CP)
    out = pl.pallas_call(
        kernel,
        out_shape=jax.ShapeDtypeStruct((B, C_out, H2 * W2), out_dtype),
        grid_spec=pltpu.PrefetchScalarGridSpec(
            num_scalar_prefetch=0,
            grid=(B, nR),
            in_specs=[
                pl.BlockSpec((1, 1, 4, CP, Lwin), lambda b, r: (b, r, 0, 0, 0)),
                pl.BlockSpec((C_out, 16 * CP), lambda b, r: (0, 0)),
                pl.BlockSpec((C_out, 1), lambda b, r: (0, 0)),
                pl.BlockSpec((2, S_blk), lambda b, r: (0, 0)),
            ],
            out_specs=pl.BlockSpec((1, C_out, S_blk), lambda b, r: (b, 0, r)),
            scratch_shapes=[pltpu.VMEM((16 * CP, S_blk), cdt)],
        ),
        compiler_params=pltpu.CompilerParams(
            dimension_semantics=("parallel", "parallel")),
    )(xb, w2d, b2, cmask)

    # free reshape of contiguous data back to NCHW (no transpose pass)
    return out.reshape(B, C_out, H2, W2)


def downsample2_reference(x, w, bias):
    """Pure-JAX NCHW reference mirroring the PyTorch module."""
    y = lax.conv_general_dilated(
        x, w, window_strides=(2, 2), padding=((1, 1), (1, 1)),
        dimension_numbers=('NCHW', 'OIHW', 'NCHW'))
    return y + bias.reshape(1, -1, 1, 1)


if __name__ == "__main__":
    B, C_in, C_out, H, W = 2, 4, 8, 16, 16

    key = jax.random.PRNGKey(0)
    k1, k2, k3 = jax.random.split(key, 3)
    w = jax.random.normal(k1, (C_out, C_in, 4, 4), jnp.float32) * 0.1
    b = jax.random.normal(k2, (C_out,), jnp.float32) * 0.1
    x = jax.random.normal(k3, (B, C_in, H, W), jnp.float32)

    out = jax.block_until_ready(downsample2_forward(x, w, b))
    ref = jax.block_until_ready(downsample2_reference(x, w, b))

    assert out.shape == (B, C_out, H // 2, W // 2)
    max_err = float(jnp.max(jnp.abs(out - ref)))
    assert jnp.allclose(out, ref, atol=1e-4, rtol=1e-4), max_err
    print("KERNEL_OK")
</pallas_src>

<mosaic_0001>
module attributes {stable_mosaic.version = 11 : i64} {
  func.func @_downsample2_kernel(%arg0: i32, %arg1: i32, %arg2: memref<1x1x4x8x82xf32, #tpu.memory_space<vmem>>, %arg3: memref<8x128xf32, #tpu.memory_space<vmem>>, %arg4: memref<8x1xf32, #tpu.memory_space<vmem>>, %arg5: memref<2x64xf32, #tpu.memory_space<vmem>>, %arg6: memref<1x8x64xf32, #tpu.memory_space<vmem>>, %arg7: memref<128x64xf32, #tpu.memory_space<vmem>>) attributes {dimension_semantics = [#tpu.dimension_semantics<parallel>, #tpu.dimension_semantics<parallel>], iteration_bounds = array<i64: 2, 1>, scalar_prefetch = 0 : i64, scratch_operands = 1 : i64, tpu.core_type = #tpu.core_type<tc>, window_params = [{transform_indices = @transform_0, window_bounds = array<i64: 1, 1, 4, 8, 82>}, {pipeline_mode = #tpu.pipeline_mode<synchronous>, transform_indices = @transform_1, window_bounds = array<i64: 8, 128>}, {pipeline_mode = #tpu.pipeline_mode<synchronous>, transform_indices = @transform_2, window_bounds = array<i64: 8, 1>}, {pipeline_mode = #tpu.pipeline_mode<synchronous>, transform_indices = @transform_3, window_bounds = array<i64: 2, 64>}, {transform_indices = @transform_4, window_bounds = array<i64: 1, 8, 64>}]} {
    %c0 = arith.constant 0 : index
    %c0_0 = arith.constant 0 : index
    %c3 = arith.constant 3 : index
    %c0_1 = arith.constant 0 : index
    %c0_2 = arith.constant 0 : index
    %0 = vector.load %arg2[%c0, %c0_0, %c3, %c0_1, %c0_2] : memref<1x1x4x8x82xf32, #tpu.memory_space<vmem>>, vector<1x1x1x8x64xf32>
    %1 = vector.shape_cast %0 : vector<1x1x1x8x64xf32> to vector<8x64xf32>
    %c0_3 = arith.constant 0 : index
    %c0_4 = arith.constant 0 : index
    %2 = vector.load %arg5[%c0_3, %c0_4] : memref<2x64xf32, #tpu.memory_space<vmem>>, vector<1x64xf32>
    %3 = vector.broadcast %2 : vector<1x64xf32> to vector<8x64xf32>
    %4 = arith.mulf %1, %3 : vector<8x64xf32>
    %c0_5 = arith.constant 0 : index
    %c0_6 = arith.constant 0 : index
    %5 = vector.load %arg7[%c0_5, %c0_6] : memref<128x64xf32, #tpu.memory_space<vmem>>, vector<8x64xf32>
    tpu.vector_store %arg7[%c0_5, %c0_6], %4 {strides = array<i32>} : memref<128x64xf32, #tpu.memory_space<vmem>>, vector<8x64xf32>,
    %c0_7 = arith.constant 0 : index
    %c0_8 = arith.constant 0 : index
    %c2 = arith.constant 2 : index
    %c0_9 = arith.constant 0 : index
    %c1 = arith.constant 1 : index
    %6 = vector.load %arg2[%c0_7, %c0_8, %c2, %c0_9, %c1] : memref<1x1x4x8x82xf32, #tpu.memory_space<vmem>>, vector<1x1x1x8x64xf32>
    %7 = vector.shape_cast %6 : vector<1x1x1x8x64xf32> to vector<8x64xf32>
    %c8 = arith.constant 8 : index
    %c0_10 = arith.constant 0 : index
    %8 = vector.load %arg7[%c8, %c0_10] : memref<128x64xf32, #tpu.memory_space<vmem>>, vector<8x64xf32>
    tpu.vector_store %arg7[%c8, %c0_10], %7 {strides = array<i32>} : memref<128x64xf32, #tpu.memory_space<vmem>>, vector<8x64xf32>,
    %c0_11 = arith.constant 0 : index
    %c0_12 = arith.constant 0 : index
    %c3_13 = arith.constant 3 : index
    %c0_14 = arith.constant 0 : index
    %c1_15 = arith.constant 1 : index
    %9 = vector.load %arg2[%c0_11, %c0_12, %c3_13, %c0_14, %c1_15] : memref<1x1x4x8x82xf32, #tpu.memory_space<vmem>>, vector<1x1x1x8x64xf32>
    %10 = vector.shape_cast %9 : vector<1x1x1x8x64xf32> to vector<8x64xf32>
    %c16 = arith.constant 16 : index
    %c0_16 = arith.constant 0 : index
    %11 = vector.load %arg7[%c16, %c0_16] : memref<128x64xf32, #tpu.memory_space<vmem>>, vector<8x64xf32>
    tpu.vector_store %arg7[%c16, %c0_16], %10 {strides = array<i32>} : memref<128x64xf32, #tpu.memory_space<vmem>>, vector<8x64xf32>,
    %c0_17 = arith.constant 0 : index
    %c0_18 = arith.constant 0 : index
    %c2_19 = arith.constant 2 : index
    %c0_20 = arith.constant 0 : index
    %c2_21 = arith.constant 2 : index
    %12 = vector.load %arg2[%c0_17, %c0_18, %c2_19, %c0_20, %c2_21] : memref<1x1x4x8x82xf32, #tpu.memory_space<vmem>>, vector<1x1x1x8x64xf32>
    %13 = vector.shape_cast %12 : vector<1x1x1x8x64xf32> to vector<8x64xf32>
    %c1_22 = arith.constant 1 : index
    %c0_23 = arith.constant 0 : index
    %14 = vector.load %arg5[%c1_22, %c0_23] : memref<2x64xf32, #tpu.memory_space<vmem>>, vector<1x64xf32>
    %15 = vector.broadcast %14 : vector<1x64xf32> to vector<8x64xf32>
    %16 = arith.mulf %13, %15 : vector<8x64xf32>
    %c24 = arith.constant 24 : index
    %c0_24 = arith.constant 0 : index
    %17 = vector.load %arg7[%c24, %c0_24] : memref<128x64xf32, #tpu.memory_space<vmem>>, vector<8x64xf32>
    tpu.vector_store %arg7[%c24, %c0_24], %16 {strides = array<i32>} : memref<128x64xf32, #tpu.memory_space<vmem>>, vector<8x64xf32>,
    %c0_25 = arith.constant 0 : index
    %c0_26 = arith.constant 0 : index
    %c1_27 = arith.constant 1 : index
    %c0_28 = arith.constant 0 : index
    %c8_29 = arith.constant 8 : index
    %18 = vector.load %arg2[%c0_25, %c0_26, %c1_27, %c0_28, %c8_29] : memref<1x1x4x8x82xf32, #tpu.memory_space<vmem>>, vector<1x1x1x8x64xf32>
    %19 = vector.shape_cast %18 : vector<1x1x1x8x64xf32> to vector<8x64xf32>
    %c0_30 = arith.constant 0 : index
    %c0_31 = arith.constant 0 : index
    %20 = vector.load %arg5[%c0_30, %c0_31] : memref<2x64xf32, #tpu.memory_space<vmem>>, vector<1x64xf32>
    %21 = vector.broadcast %20 : vector<1x64xf32> to vector<8x64xf32>
    %22 = arith.mulf %19, %21 : vector<8x64xf32>
    %c32 = arith.constant 32 : index
    %c0_32 = arith.constant 0 : index
    %23 = vector.load %arg7[%c32, %c0_32] : memref<128x64xf32, #tpu.memory_space<vmem>>, vector<8x64xf32>
    tpu.vector_store %arg7[%c32, %c0_32], %22 {strides = array<i32>} : memref<128x64xf32, #tpu.memory_space<vmem>>, vector<8x64xf32>,
    %c0_33 = arith.constant 0 : index
    %c0_34 = arith.constant 0 : index
    %c0_35 = arith.constant 0 : index
    %c0_36 = arith.constant 0 : index
    %c9 = arith.constant 9 : index
    %24 = vector.load %arg2[%c0_33, %c0_34, %c0_35, %c0_36, %c9] : memref<1x1x4x8x82xf32, #tpu.memory_space<vmem>>, vector<1x1x1x8x64xf32>
    %25 = vector.shape_cast %24 : vector<1x1x1x8x64xf32> to vector<8x64xf32>
    %c40 = arith.constant 40 : index
    %c0_37 = arith.constant 0 : index
    %26 = vector.load %arg7[%c40, %c0_37] : memref<128x64xf32, #tpu.memory_space<vmem>>, vector<8x64xf32>
    tpu.vector_store %arg7[%c40, %c0_37], %25 {strides = array<i32>} : memref<128x64xf32, #tpu.memory_space<vmem>>, vector<8x64xf32>,
    %c0_38 = arith.constant 0 : index
    %c0_39 = arith.constant 0 : index
    %c1_40 = arith.constant 1 : index
    %c0_41 = arith.constant 0 : index
    %c9_42 = arith.constant 9 : index
    %27 = vector.load %arg2[%c0_38, %c0_39, %c1_40, %c0_41, %c9_42] : memref<1x1x4x8x82xf32, #tpu.memory_space<vmem>>, vector<1x1x1x8x64xf32>
    %28 = vector.shape_cast %27 : vector<1x1x1x8x64xf32> to vector<8x64xf32>
    %c48 = arith.constant 48 : index
    %c0_43 = arith.constant 0 : index
    %29 = vector.load %arg7[%c48, %c0_43] : memref<128x64xf32, #tpu.memory_space<vmem>>, vector<8x64xf32>
    tpu.vector_store %arg7[%c48, %c0_43], %28 {strides = array<i32>} : memref<128x64xf32, #tpu.memory_space<vmem>>, vector<8x64xf32>,
    %c0_44 = arith.constant 0 : index
    %c0_45 = arith.constant 0 : index
    %c0_46 = arith.constant 0 : index
    %c0_47 = arith.constant 0 : index
    %c10 = arith.constant 10 : index
    %30 = vector.load %arg2[%c0_44, %c0_45, %c0_46, %c0_47, %c10] : memref<1x1x4x8x82xf32, #tpu.memory_space<vmem>>, vector<1x1x1x8x64xf32>
    %31 = vector.shape_cast %30 : vector<1x1x1x8x64xf32> to vector<8x64xf32>
    %c1_48 = arith.constant 1 : index
    %c0_49 = arith.constant 0 : index
    %32 = vector.load %arg5[%c1_48, %c0_49] : memref<2x64xf32, #tpu.memory_space<vmem>>, vector<1x64xf32>
    %33 = vector.broadcast %32 : vector<1x64xf32> to vector<8x64xf32>
    %34 = arith.mulf %31, %33 : vector<8x64xf32>
    %c56 = arith.constant 56 : index
    %c0_50 = arith.constant 0 : index
    %35 = vector.load %arg7[%c56, %c0_50] : memref<128x64xf32, #tpu.memory_space<vmem>>, vector<8x64xf32>
    tpu.vector_store %arg7[%c56, %c0_50], %34 {strides = array<i32>} : memref<128x64xf32, #tpu.memory_space<vmem>>, vector<8x64xf32>,
    %c0_51 = arith.constant 0 : index
    %c0_52 = arith.constant 0 : index
    %c3_53 = arith.constant 3 : index
    %c0_54 = arith.constant 0 : index
    %c8_55 = arith.constant 8 : index
    %36 = vector.load %arg2[%c0_51, %c0_52, %c3_53, %c0_54, %c8_55] : memref<1x1x4x8x82xf32, #tpu.memory_space<vmem>>, vector<1x1x1x8x64xf32>
    %37 = vector.shape_cast %36 : vector<1x1x1x8x64xf32> to vector<8x64xf32>
    %c0_56 = arith.constant 0 : index
    %c0_57 = arith.constant 0 : index
    %38 = vector.load %arg5[%c0_56, %c0_57] : memref<2x64xf32, #tpu.memory_space<vmem>>, vector<1x64xf32>
    %39 = vector.broadcast %38 : vector<1x64xf32> to vector<8x64xf32>
    %40 = arith.mulf %37, %39 : vector<8x64xf32>
    %c64 = arith.constant 64 : index
    %c0_58 = arith.constant 0 : index
    %41 = vector.load %arg7[%c64, %c0_58] : memref<128x64xf32, #tpu.memory_space<vmem>>, vector<8x64xf32>
    tpu.vector_store %arg7[%c64, %c0_58], %40 {strides = array<i32>} : memref<128x64xf32, #tpu.memory_space<vmem>>, vector<8x64xf32>,
    %c0_59 = arith.constant 0 : index
    %c0_60 = arith.constant 0 : index
    %c2_61 = arith.constant 2 : index
    %c0_62 = arith.constant 0 : index
    %c9_63 = arith.constant 9 : index
    %42 = vector.load %arg2[%c0_59, %c0_60, %c2_61, %c0_62, %c9_63] : memref<1x1x4x8x82xf32, #tpu.memory_space<vmem>>, vector<1x1x1x8x64xf32>
    %43 = vector.shape_cast %42 : vector<1x1x1x8x64xf32> to vector<8x64xf32>
    %c72 = arith.constant 72 : index
    %c0_64 = arith.constant 0 : index
    %44 = vector.load %arg7[%c72, %c0_64] : memref<128x64xf32, #tpu.memory_space<vmem>>, vector<8x64xf32>
    tpu.vector_store %arg7[%c72, %c0_64], %43 {strides = array<i32>} : memref<128x64xf32, #tpu.memory_space<vmem>>, vector<8x64xf32>,
    %c0_65 = arith.constant 0 : index
    %c0_66 = arith.constant 0 : index
    %c3_67 = arith.constant 3 : index
    %c0_68 = arith.constant 0 : index
    %c9_69 = arith.constant 9 : index
    %45 = vector.load %arg2[%c0_65, %c0_66, %c3_67, %c0_68, %c9_69] : memref<1x1x4x8x82xf32, #tpu.memory_space<vmem>>, vector<1x1x1x8x64xf32>
    %46 = vector.shape_cast %45 : vector<1x1x1x8x64xf32> to vector<8x64xf32>
    %c80 = arith.constant 80 : index
    %c0_70 = arith.constant 0 : index
    %47 = vector.load %arg7[%c80, %c0_70] : memref<128x64xf32, #tpu.memory_space<vmem>>, vector<8x64xf32>
    tpu.vector_store %arg7[%c80, %c0_70], %46 {strides = array<i32>} : memref<128x64xf32, #tpu.memory_space<vmem>>, vector<8x64xf32>,
    %c0_71 = arith.constant 0 : index
    %c0_72 = arith.constant 0 : index
    %c2_73 = arith.constant 2 : index
    %c0_74 = arith.constant 0 : index
    %c10_75 = arith.constant 10 : index
    %48 = vector.load %arg2[%c0_71, %c0_72, %c2_73, %c0_74, %c10_75] : memref<1x1x4x8x82xf32, #tpu.memory_space<vmem>>, vector<1x1x1x8x64xf32>
    %49 = vector.shape_cast %48 : vector<1x1x1x8x64xf32> to vector<8x64xf32>
    %c1_76 = arith.constant 1 : index
    %c0_77 = arith.constant 0 : index
    %50 = vector.load %arg5[%c1_76, %c0_77] : memref<2x64xf32, #tpu.memory_space<vmem>>, vector<1x64xf32>
    %51 = vector.broadcast %50 : vector<1x64xf32> to vector<8x64xf32>
    %52 = arith.mulf %49, %51 : vector<8x64xf32>
    %c88 = arith.constant 88 : index
    %c0_78 = arith.constant 0 : index
    %53 = vector.load %arg7[%c88, %c0_78] : memref<128x64xf32, #tpu.memory_space<vmem>>, vector<8x64xf32>
    tpu.vector_store %arg7[%c88, %c0_78], %52 {strides = array<i32>} : memref<128x64xf32, #tpu.memory_space<vmem>>, vector<8x64xf32>,
    %c0_79 = arith.constant 0 : index
    %c0_80 = arith.constant 0 : index
    %c1_81 = arith.constant 1 : index
    %c0_82 = arith.constant 0 : index
    %c16_83 = arith.constant 16 : index
    %54 = vector.load %arg2[%c0_79, %c0_80, %c1_81, %c0_82, %c16_83] : memref<1x1x4x8x82xf32, #tpu.memory_space<vmem>>, vector<1x1x1x8x64xf32>
    %55 = vector.shape_cast %54 : vector<1x1x1x8x64xf32> to vector<8x64xf32>
    %c0_84 = arith.constant 0 : index
    %c0_85 = arith.constant 0 : index
    %56 = vector.load %arg5[%c0_84, %c0_85] : memref<2x64xf32, #tpu.memory_space<vmem>>, vector<1x64xf32>
    %57 = vector.broadcast %56 : vector<1x64xf32> to vector<8x64xf32>
    %58 = arith.mulf %55, %57 : vector<8x64xf32>
    %c96 = arith.constant 96 : index
    %c0_86 = arith.constant 0 : index
    %59 = vector.load %arg7[%c96, %c0_86] : memref<128x64xf32, #tpu.memory_space<vmem>>, vector<8x64xf32>
    tpu.vector_store %arg7[%c96, %c0_86], %58 {strides = array<i32>} : memref<128x64xf32, #tpu.memory_space<vmem>>, vector<8x64xf32>,
    %c0_87 = arith.constant 0 : index
    %c0_88 = arith.constant 0 : index
    %c0_89 = arith.constant 0 : index
    %c0_90 = arith.constant 0 : index
    %c17 = arith.constant 17 : index
    %60 = vector.load %arg2[%c0_87, %c0_88, %c0_89, %c0_90, %c17] : memref<1x1x4x8x82xf32, #tpu.memory_space<vmem>>, vector<1x1x1x8x64xf32>
    %61 = vector.shape_cast %60 : vector<1x1x1x8x64xf32> to vector<8x64xf32>
    %c104 = arith.constant 104 : index
    %c0_91 = arith.constant 0 : index
    %62 = vector.load %arg7[%c104, %c0_91] : memref<128x64xf32, #tpu.memory_space<vmem>>, vector<8x64xf32>
    tpu.vector_store %arg7[%c104, %c0_91], %61 {strides = array<i32>} : memref<128x64xf32, #tpu.memory_space<vmem>>, vector<8x64xf32>,
    %c0_92 = arith.constant 0 : index
    %c0_93 = arith.constant 0 : index
    %c1_94 = arith.constant 1 : index
    %c0_95 = arith.constant 0 : index
    %c17_96 = arith.constant 17 : index
    %63 = vector.load %arg2[%c0_92, %c0_93, %c1_94, %c0_95, %c17_96] : memref<1x1x4x8x82xf32, #tpu.memory_space<vmem>>, vector<1x1x1x8x64xf32>
    %64 = vector.shape_cast %63 : vector<1x1x1x8x64xf32> to vector<8x64xf32>
    %c112 = arith.constant 112 : index
    %c0_97 = arith.constant 0 : index
    %65 = vector.load %arg7[%c112, %c0_97] : memref<128x64xf32, #tpu.memory_space<vmem>>, vector<8x64xf32>
    tpu.vector_store %arg7[%c112, %c0_97], %64 {strides = array<i32>} : memref<128x64xf32, #tpu.memory_space<vmem>>, vector<8x64xf32>,
    %c0_98 = arith.constant 0 : index
    %c0_99 = arith.constant 0 : index
    %c0_100 = arith.constant 0 : index
    %c0_101 = arith.constant 0 : index
    %c18 = arith.constant 18 : index
    %66 = vector.load %arg2[%c0_98, %c0_99, %c0_100, %c0_101, %c18] : memref<1x1x4x8x82xf32, #tpu.memory_space<vmem>>, vector<1x1x1x8x64xf32>
    %67 = vector.shape_cast %66 : vector<1x1x1x8x64xf32> to vector<8x64xf32>
    %c1_102 = arith.constant 1 : index
    %c0_103 = arith.constant 0 : index
    %68 = vector.load %arg5[%c1_102, %c0_103] : memref<2x64xf32, #tpu.memory_space<vmem>>, vector<1x64xf32>
    %69 = vector.broadcast %68 : vector<1x64xf32> to vector<8x64xf32>
    %70 = arith.mulf %67, %69 : vector<8x64xf32>
    %c120 = arith.constant 120 : index
    %c0_104 = arith.constant 0 : index
    %71 = vector.load %arg7[%c120, %c0_104] : memref<128x64xf32, #tpu.memory_space<vmem>>, vector<8x64xf32>
    tpu.vector_store %arg7[%c120, %c0_104], %70 {strides = array<i32>} : memref<128x64xf32, #tpu.memory_space<vmem>>, vector<8x64xf32>,
    %c0_105 = arith.constant 0 : index
    %c0_106 = arith.constant 0 : index
    %72 = vector.load %arg3[%c0_105, %c0_106] : memref<8x128xf32, #tpu.memory_space<vmem>>, vector<8x128xf32>
    %c0_107 = arith.constant 0 : index
    %c0_108 = arith.constant 0 : index
    %73 = vector.load %arg7[%c0_107, %c0_108] : memref<128x64xf32, #tpu.memory_space<vmem>>, vector<128x64xf32>
    %cst = arith.constant dense<0.000000e+00> : vector<8x64xf32>
    %74 = tpu.matmul %72, %73, %cst {dimension_numbers = #tpu.dot_dimension_numbers<[1], [0], [0], [1], [0, 0, 1, 1], [], []>} : vector<8x128xf32>, vector<128x64xf32>, vector<8x64xf32> -> vector<8x64xf32>
    %c0_109 = arith.constant 0 : index
    %c0_110 = arith.constant 0 : index
    %75 = vector.load %arg4[%c0_109, %c0_110] : memref<8x1xf32, #tpu.memory_space<vmem>>, vector<8x1xf32>
    %76 = vector.broadcast %75 : vector<8x1xf32> to vector<8x64xf32>
    %77 = arith.addf %74, %76 : vector<8x64xf32>
    %c0_111 = arith.constant 0 : index
    %c0_112 = arith.constant 0 : index
    %c0_113 = arith.constant 0 : index
    %78 = vector.load %arg6[%c0_111, %c0_112, %c0_113] : memref<1x8x64xf32, #tpu.memory_space<vmem>>, vector<1x8x64xf32>
    %79 = vector.shape_cast %78 : vector<1x8x64xf32> to vector<8x64xf32>
    %80 = vector.shape_cast %77 : vector<8x64xf32> to vector<1x8x64xf32>
    tpu.vector_store %arg6[%c0_111, %c0_112, %c0_113], %80 {strides = array<i32>} : memref<1x8x64xf32, #tpu.memory_space<vmem>>, vector<1x8x64xf32>,
    return
  }
  func.func @transform_0(%arg0: i32, %arg1: i32) -> (i32, i32, i32, i32, i32) {
    %c0_i32 = arith.constant 0 : i32
    %c0_i32_0 = arith.constant 0 : i32
    %c0_i32_1 = arith.constant 0 : i32
    %c0_i32_2 = arith.constant 0 : i32
    return %arg0, %arg1, %c0_i32, %c0_i32_0, %c0_i32_1 : i32, i32, i32, i32, i32
  }
  func.func @transform_1(%arg0: i32, %arg1: i32) -> (i32, i32) {
    %c0_i32 = arith.constant 0 : i32
    %c0_i32_0 = arith.constant 0 : i32
    %c0_i32_1 = arith.constant 0 : i32
    return %c0_i32, %c0_i32_0 : i32, i32
  }
  func.func @transform_2(%arg0: i32, %arg1: i32) -> (i32, i32) {
    %c0_i32 = arith.constant 0 : i32
    %c0_i32_0 = arith.constant 0 : i32
    %c0_i32_1 = arith.constant 0 : i32
    return %c0_i32, %c0_i32_0 : i32, i32
  }
  func.func @transform_3(%arg0: i32, %arg1: i32) -> (i32, i32) {
    %c0_i32 = arith.constant 0 : i32
    %c0_i32_0 = arith.constant 0 : i32
    %c0_i32_1 = arith.constant 0 : i32
    return %c0_i32, %c0_i32_0 : i32, i32
  }
  func.func @transform_4(%arg0: i32, %arg1: i32) -> (i32, i32, i32) {
    %c0_i32 = arith.constant 0 : i32
    %c0_i32_0 = arith.constant 0 : i32
    return %arg0, %c0_i32, %arg1 : i32, i32, i32
  }
}

</mosaic_0001>

<llo_original>
// kernel: tpu_custom_call.1
$region0: #{tpu_custom_call.1}
  #allocation0 [shape = 'u32[]', space=smem, size = 0x4, offset = 0x4, fixed_abs, tag = 'smem constant byte address 0x4 - core index']
  #allocation1 [shape = 'u32[72,128]{1,0:T(1,128)}', space=vmem, size = 0x9000, scoped, tag = 'internal scratch']
  #allocation2 [shape = 'f32[128,64]{1,0:T(8,128)}', space=vmem, size = 0x10000, scoped, tag = 'scratch operand']
  %s0 = inlined_call_operand.hbm [shape: f32[2,1,4,8,82], index: 0, kind: input, shape index: {}]
  %s1 = inlined_call_operand.vmem [shape: f32[8,128], index: 1, kind: input, shape index: {}]
  %s2 = inlined_call_operand.vmem [shape: f32[8,1], index: 2, kind: input, shape index: {}]
  %s3 = inlined_call_operand.hbm [shape: f32[2,64], index: 3, kind: input, shape index: {}]
  %s4 = inlined_call_operand.hbm [shape: f32[2,8,64], index: 4, kind: output, shape index: {}]
  %s5 = sld [smem:[#allocation0]]
  $region57: #{tpu_custom_call.1} parent=0
    _
  %s7 = ssub.s32 1, %s5
  %s8 = scalar_select 0, %s7, %s5
  $region1: #{tpu_custom_call.1} parent=0
    #allocation3 [shape = 'u8[32768]{0}', space=vmem, size = 0x8000, scoped, tag = 'input window, operand 0']
    #allocation4 [shape = 's32[2]{0}', space=sflag, size = 0x8, scoped, tag = 'scoped memory for tpu_custom_call.1']
    #allocation5 [shape = 's32[2]{0}', space=sflag, size = 0x8, scoped, tag = 'scoped memory for tpu_custom_call.1']
    #allocation6 [shape = 'u8[1024]{0}', space=vmem, size = 0x400, scoped, tag = 'input window, operand 3, single buffered']
    #allocation7 [shape = 's32[1]{0}', space=sflag, size = 0x4, scoped, tag = 'scoped memory for tpu_custom_call.1']
    #allocation8 [shape = 'u8[8192]{0}', space=vmem, size = 0x2000, scoped, tag = 'output window, operand 0']
    %9 = vsyncpa [#allocation4], 0
    %s10 = scalar_lea.sflag [#allocation4], 1
    %11 = vsyncpa %s10, 0
    %12 = vsyncpa [#allocation7], 0
    %13 = vsyncpa [#allocation5], 0
    %s14 = scalar_lea.sflag [#allocation5], 1
    %15 = vsyncpa %s14, 0
    loop: start=0, step=1, limit=4
    $region2: #{tpu_custom_call.1} parent=1 // loop_pre_header
      _
    $region3: #{tpu_custom_call.1} parent=1 // loop_header
      %s17 = sphi 0, %s21
      %p18 = scmp.ge.s32.totalorder %s17, 4
      %s24 = sphi 0, %s36
      %s25 = sphi 0, %s32
      %s26 = sphi 0, %s24
      %s27 = sphi 0, %s25
      %s28 = sphi 0, %s26
      %s29 = sphi 0, %s27
      %s41 = sphi 0, %s43
      %s44 = sphi 0, %s41
      %s45 = sphi 0, %s44
      %s61 = sphi 0, %s45
      %s65 = sphi 0, %s65
      %s67 = sphi 0, %s65
      %s68 = sphi 0, %s67
      %s82 = sphi 0, %s68
      %s86 = sphi 0, %s86
      %s88 = sphi 0, %s86
      %s89 = sphi 0, %s88
      %s103 = sphi 0, %s89
      %s107 = sphi 0, %s107
      %s109 = sphi 0, %s107
      %s110 = sphi 0, %s109
      %s124 = sphi 0, %s110
      %s132 = sphi 0, %s134
      %s135 = sphi 0, %s132
      %s136 = sphi 0, %s135
      %s152 = sphi 0, %s136
    $region4: #{tpu_custom_call.1} parent=1 // loop_header_branch
      %20 = sbr.rel (%p18) target = $region8
    $region5: #{tpu_custom_call.1} parent=1 // loop_body
      %s22 = ssub.s32 %s17, 1
      %s23 = ssub.s32 %s17, 2
      %s30 = sadd.s32 1, %s25
      %p31 = scmp.ge.s32.totalorder %s30, 1
      %s32 = scalar_select %p31, 0, %s30
      %s33 = sadd.s32 1, %s24
      %s34 = scalar_select %p31, %s33, %s24
      %p35 = scmp.ge.s32.totalorder %s34, 2
      %s36 = scalar_select %p35, 0, %s34
      %s37 = ssub.s32 %s24, %s36
      %s38 = ssub.s32 %s25, %s32
      %s39 = sor.u32 %s37, %s38
      %p40 = scmp.eq.s32.totalorder %s39, 0
      %s42 = sadd.s32 %s41, 1
      %s43 = scalar_select %p40, %s41, %s42
      %p46 = pneg %p40
      %p47 = scmp.eq.s32.totalorder %s17, 1
      %p48 = por %p46, %p47
      %p49 = scmp.ne.s32.totalorder %s41, %s44
      %p50 = scmp.eq.s32.totalorder %s17, 0
      %p51 = por %p49, %p50
      %p52 = scmp.ne.s32.totalorder %s41, %s44
      %p53 = scmp.eq.s32.totalorder %s22, 1
      %p54 = por %p52, %p53
      %p55 = scmp.ne.s32.totalorder %s44, %s45
      %p56 = scmp.eq.s32.totalorder %s22, 0
      %p57 = por %p55, %p56
      %p58 = scmp.ne.s32.totalorder %s44, %s45
      %p59 = scmp.eq.s32.totalorder %s23, 1
      %p60 = por %p58, %p59
      %p62 = scmp.ne.s32.totalorder %s45, %s61
      %p63 = scmp.eq.s32.totalorder %s23, 0
      %p64 = por %p62, %p63
      %s66 = sadd.s32 %s65, 1
      %p69 = scmp.eq.s32.totalorder %s17, 1
      %p70 = scmp.ne.s32.totalorder %s65, %s67
      %p71 = scmp.eq.s32.totalorder %s17, 0
      %p72 = por %p70, %p71
      %p73 = scmp.ne.s32.totalorder %s65, %s67
      %p74 = scmp.eq.s32.totalorder %s22, 1
      %p75 = por %p73, %p74
      %p76 = scmp.ne.s32.totalorder %s67, %s68
      %p77 = scmp.eq.s32.totalorder %s22, 0
      %p78 = por %p76, %p77
      %p79 = scmp.ne.s32.totalorder %s67, %s68
      %p80 = scmp.eq.s32.totalorder %s23, 1
      %p81 = por %p79, %p80
      %p83 = scmp.ne.s32.totalorder %s68, %s82
      %p84 = scmp.eq.s32.totalorder %s23, 0
      %p85 = por %p83, %p84
      %s87 = sadd.s32 %s86, 1
      %p90 = scmp.eq.s32.totalorder %s17, 1
      %p91 = scmp.ne.s32.totalorder %s86, %s88
      %p92 = scmp.eq.s32.totalorder %s17, 0
      %p93 = por %p91, %p92
      %p94 = scmp.ne.s32.totalorder %s86, %s88
      %p95 = scmp.eq.s32.totalorder %s22, 1
      %p96 = por %p94, %p95
      %p97 = scmp.ne.s32.totalorder %s88, %s89
      %p98 = scmp.eq.s32.totalorder %s22, 0
      %p99 = por %p97, %p98
      %p100 = scmp.ne.s32.totalorder %s88, %s89
      %p101 = scmp.eq.s32.totalorder %s23, 1
      %p102 = por %p100, %p101
      %p104 = scmp.ne.s32.totalorder %s89, %s103
      %p105 = scmp.eq.s32.totalorder %s23, 0
      %p106 = por %p104, %p105
      %s108 = sadd.s32 %s107, 1
      %p111 = scmp.eq.s32.totalorder %s17, 1
      %p112 = scmp.ne.s32.totalorder %s107, %s109
      %p113 = scmp.eq.s32.totalorder %s17, 0
      %p114 = por %p112, %p113
      %p115 = scmp.ne.s32.totalorder %s107, %s109
      %p116 = scmp.eq.s32.totalorder %s22, 1
      %p117 = por %p115, %p116
      %p118 = scmp.ne.s32.totalorder %s109, %s110
      %p119 = scmp.eq.s32.totalorder %s22, 0
      %p120 = por %p118, %p119
      %p121 = scmp.ne.s32.totalorder %s109, %s110
      %p122 = scmp.eq.s32.totalorder %s23, 1
      %p123 = por %p121, %p122
      %p125 = scmp.ne.s32.totalorder %s110, %s124
      %p126 = scmp.eq.s32.totalorder %s23, 0
      %p127 = por %p125, %p126
      %s128 = ssub.s32 %s24, %s36
      %s129 = ssub.s32 %s25, %s32
      %s130 = sor.u32 %s128, %s129
      %p131 = scmp.eq.s32.totalorder %s130, 0
      %s133 = sadd.s32 %s132, 1
      %s134 = scalar_select %p131, %s132, %s133
      %p137 = pneg %p131
      %p138 = scmp.eq.s32.totalorder %s17, 1
      %p139 = por %p137, %p138
      %p140 = scmp.ne.s32.totalorder %s132, %s135
      %p141 = scmp.eq.s32.totalorder %s17, 0
      %p142 = por %p140, %p141
      %p143 = scmp.ne.s32.totalorder %s132, %s135
      %p144 = scmp.eq.s32.totalorder %s22, 1
      %p145 = por %p143, %p144
      %p146 = scmp.ne.s32.totalorder %s135, %s136
      %p147 = scmp.eq.s32.totalorder %s22, 0
      %p148 = por %p146, %p147
      %p149 = scmp.ne.s32.totalorder %s135, %s136
      %p150 = scmp.eq.s32.totalorder %s23, 1
      %p151 = por %p149, %p150
      %p153 = scmp.ne.s32.totalorder %s136, %s152
      %p154 = scmp.eq.s32.totalorder %s23, 0
      %p155 = por %p153, %p154
      %p156 = scmp.le.s32.totalorder 1, %s17
      %p157 = scmp.lt.s32.totalorder %s17, 3
      %p158 = pnand %p156, %p157
      %p159 = pneg %p158
      // Predicated region
      $region9: #{tpu_custom_call.1} parent=5 // pred_check
        _
      $region10: #{tpu_custom_call.1} parent=5 // pred_check_branch
        %161 = sbr.rel (%p158) target = $region12
      $region11: #{tpu_custom_call.1} parent=5 // pred_region
        %s162 = ssub.s32 %s17, 1
        // Predicated region
        $region13: #{tpu_custom_call.1} parent=11 // pred_check
          %p163 = pneg %p78
        $region14: #{tpu_custom_call.1} parent=11 // pred_check_branch
          %165 = sbr.rel (%p163) target = $region16
        $region15: #{tpu_custom_call.1} parent=11 // pred_region
          _
        $region16: #{tpu_custom_call.1} parent=11 // pred_fallthru
          _
        // Predicated region
        $region17: #{tpu_custom_call.1} parent=11 // pred_check
          %p166 = pneg %p99
        $region18: #{tpu_custom_call.1} parent=11 // pred_check_branch
          %168 = sbr.rel (%p166) target = $region20
        $region19: #{tpu_custom_call.1} parent=11 // pred_region
          _
        $region20: #{tpu_custom_call.1} parent=11 // pred_fallthru
          _
        // Predicated region
        $region21: #{tpu_custom_call.1} parent=11 // pred_check
          %p169 = pneg %p120
        $region22: #{tpu_custom_call.1} parent=11 // pred_check_branch
          %171 = sbr.rel (%p169) target = $region24
        $region23: #{tpu_custom_call.1} parent=11 // pred_region
          %173 = vsyncadd [#allocation7], 0
          %s175 = sshll.u32 %s3, 4
          %s176 = int_to_ptr.hbm [resolvable:$true] %s175
          %s177 = sshll.u32 [#allocation6], 4
          %s178 = int_to_ptr.vmem [resolvable:$true] %s177
          %180 = dma.hbm_to_vmem [thread:$0]  %s176, 32, %s178, [#allocation7]
        $region24: #{tpu_custom_call.1} parent=11 // pred_fallthru
          _
      $region12: #{tpu_custom_call.1} parent=5 // pred_fallthru
        _
      %p181 = scmp.lt.s32.totalorder %s17, 2
      // Predicated region
      $region25: #{tpu_custom_call.1} parent=5 // pred_check
        %p182 = pneg %p181
      $region26: #{tpu_custom_call.1} parent=5 // pred_check_branch
        %184 = sbr.rel (%p182) target = $region28
      $region27: #{tpu_custom_call.1} parent=5 // pred_region
        // Predicated region
        $region29: #{tpu_custom_call.1} parent=27 // pred_check
          %p185 = pneg %p51
        $region30: #{tpu_custom_call.1} parent=27 // pred_check_branch
          %187 = sbr.rel (%p185) target = $region32
        $region31: #{tpu_custom_call.1} parent=27 // pred_region
          %s188 = sand.u32 %s41, 1
          %s189 = scalar_lea.sflag [#allocation4], %s188
          %s190 = sand.u32 %s41, 1
          %s191 = smul.addr %s190, 32
          %s192 = scalar_lea.vmem [#allocation3], %s191
          %194 = vsyncadd %s189, 0
          %s195 = smul.addr %s25, 4
          %s196 = smul.addr %s24, 4
          %s197 = sadd.s32 %s195, %s196
          %s198 = smul.addr %s197, 8
          %s199 = scalar_lea.hbm %s0, %s198
          %s200 = sshll.u32 %s199, 4
          %s201 = int_to_ptr.hbm [resolvable:$true] %s200
          %s202 = sshll.u32 %s192, 4
          %s203 = int_to_ptr.vmem [resolvable:$true] %s202
          %208 = dma.hbm_to_vmem [thread:$0]  %s201, 512, %s203, %s189, 128, 128, 8
        $region32: #{tpu_custom_call.1} parent=27 // pred_fallthru
          _
      $region28: #{tpu_custom_call.1} parent=5 // pred_fallthru
        _
      %p209 = scmp.le.s32.totalorder 1, %s17
      %p210 = scmp.lt.s32.totalorder %s17, 3
      %p211 = pnand %p209, %p210
      %p212 = pneg %p211
      // Predicated region
      $region33: #{tpu_custom_call.1} parent=5 // pred_check
        _
      $region34: #{tpu_custom_call.1} parent=5 // pred_check_branch
        %214 = sbr.rel (%p211) target = $region36
      $region35: #{tpu_custom_call.1} parent=5 // pred_region
        %s215 = ssub.s32 %s17, 1
        %s216 = sand.u32 %s44, 1
        %s217 = scalar_lea.sflag [#allocation4], %s216
        %s218 = sand.u32 %s44, 1
        %s219 = smul.addr %s218, 32
        %s220 = scalar_lea.vmem [#allocation3], %s219
        // Predicated region
        $region37: #{tpu_custom_call.1} parent=35 // pred_check
          %p221 = pneg %p57
        $region38: #{tpu_custom_call.1} parent=35 // pred_check_branch
          %223 = sbr.rel (%p221) target = $region40
        $region39: #{tpu_custom_call.1} parent=35 // pred_region
          %225 = dma.done %s217, 512
        $region40: #{tpu_custom_call.1} parent=35 // pred_fallthru
          _
        // Predicated region
        $region41: #{tpu_custom_call.1} parent=35 // pred_check
          %p226 = pneg %p120
        $region42: #{tpu_custom_call.1} parent=35 // pred_check_branch
          %228 = sbr.rel (%p226) target = $region44
        $region43: #{tpu_custom_call.1} parent=35 // pred_region
          %230 = dma.done [#allocation7], 32
        $region44: #{tpu_custom_call.1} parent=35 // pred_fallthru
          _
        %s231 = sand.u32 %s44, 1
        %s232 = scalar_lea.sflag [#allocation4], %s231
        %s233 = sand.u32 %s44, 1
        %s234 = smul.addr %s233, 32
        %s235 = scalar_lea.vmem [#allocation3], %s234
        %p236 = pneg %p57
        %p237 = pneg %p54
        %p238 = pneg %p78
        %p239 = pneg %p75
        %p240 = pneg %p99
        %p241 = pneg %p96
        %p242 = pneg %p120
        %p243 = pneg %p117
        %p244 = pneg %p148
        %p245 = pneg %p145
        %s246 = sand.u32 %s135, 1
        %s247 = scalar_lea.sflag [#allocation5], %s246
        %s248 = sand.u32 %s135, 1
        %s249 = smul.addr %s248, 8
        %s250 = scalar_lea.vmem [#allocation8], %s249
        %s251 = scalar_lea.vmem %s220, 24 [#allocation3]
        %v252 = vld [vmem:[%s251] sm:$0xff]
        %v253 = vld [vmem:[#allocation6] sm:$0x1]
        %v254 = vperm.slane %v253, 0
        %v255 = vmul.f32 %v252, %v254
        %vm256 = vcmask 523264
        %257 = vst.msk [vmem:[#allocation2] sm:$0xff] %vm256, %v255
        %s258 = scalar_lea.vmem %s220, 16 [#allocation3]
        %v259 = vld [vmem:[%s258] sm:$0xff]
        %261 = vrot.lane.b32.xlu0 %v259, 127
        %v262 = vpop.permute.xlu0 %261
        %264 = vst.msk [vmem:[#allocation2 + $0x8] sm:$0xff] %vm256, %v262
        %v265 = vld [vmem:[%s251] sm:$0xff]
        %267 = vrot.lane.b32.xlu0 %v265, 127
        %v268 = vpop.permute.xlu0 %267
        %270 = vst.msk [vmem:[#allocation2 + $0x10] sm:$0xff] %vm256, %v268
        %v271 = vld [vmem:[%s258] sm:$0xff]
        %v272 = vld [vmem:[#allocation6 + $0x1] sm:$0x1]
        %v273 = vperm.slane %v272, 0
        %275 = vrot.lane.b32.xlu0 %v273, 2
        %v276 = vpop.permute.xlu0 %275
        %v278 = vmul.f32 %v271, %v276
        %280 = vrot.lane.b32.xlu0 %v278, 126
        %v281 = vpop.permute.xlu0 %280
        %283 = vst.msk [vmem:[#allocation2 + $0x18] sm:$0xff] %vm256, %v281
        %s284 = scalar_lea.vmem %s220, 8 [#allocation3]
        %v285 = vld [vmem:[%s284] sm:$0xff]
        %v286 = vld [vmem:[#allocation6] sm:$0x1]
        %v287 = vperm.slane %v286, 0
        %289 = vrot.lane.b32.xlu0 %v287, 8
        %v290 = vpop.permute.xlu0 %289
        %v292 = vmul.f32 %v285, %v290
        %294 = vrot.lane.b32.xlu0 %v292, 120
        %v295 = vpop.permute.xlu0 %294
        %297 = vst.msk [vmem:[#allocation2 + $0x20] sm:$0xff] %vm256, %v295
        %v298 = vld [vmem:[%s220] sm:$0xff]
        %300 = vrot.lane.b32.xlu0 %v298, 119
        %v301 = vpop.permute.xlu0 %300
        %303 = vst.msk [vmem:[#allocation2 + $0x28] sm:$0xff] %vm256, %v301
        %v304 = vld [vmem:[%s284] sm:$0xff]
        %306 = vrot.lane.b32.xlu0 %v304, 119
        %v307 = vpop.permute.xlu0 %306
        %309 = vst.msk [vmem:[#allocation2 + $0x30] sm:$0xff] %vm256, %v307
        %v310 = vld [vmem:[%s220] sm:$0xff]
        %v311 = vld [vmem:[#allocation6 + $0x1] sm:$0x1]
        %v312 = vperm.slane %v311, 0
        %314 = vrot.lane.b32.xlu0 %v312, 10
        %v315 = vpop.permute.xlu0 %314
        %v317 = vmul.f32 %v310, %v315
        %319 = vrot.lane.b32.xlu0 %v317, 118
        %v320 = vpop.permute.xlu0 %319
        %322 = vst.msk [vmem:[#allocation2 + $0x38] sm:$0xff] %vm256, %v320
        %v323 = vld [vmem:[%s251] sm:$0xff]
        %v324 = vld [vmem:[#allocation6] sm:$0x1]
        %v325 = vperm.slane %v324, 0
        %327 = vrot.lane.b32.xlu0 %v325, 8
        %v328 = vpop.permute.xlu0 %327
        %v330 = vmul.f32 %v323, %v328
        %332 = vrot.lane.b32.xlu0 %v330, 120
        %v333 = vpop.permute.xlu0 %332
        %335 = vst.msk [vmem:[#allocation2 + $0x40] sm:$0xff] %vm256, %v333
        %v336 = vld [vmem:[%s258] sm:$0xff]
        %338 = vrot.lane.b32.xlu0 %v336, 119
        %v339 = vpop.permute.xlu0 %338
        %341 = vst.msk [vmem:[#allocation2 + $0x48] sm:$0xff] %vm256, %v339
        %v342 = vld [vmem:[%s251] sm:$0xff]
        %344 = vrot.lane.b32.xlu0 %v342, 119
        %v345 = vpop.permute.xlu0 %344
        %347 = vst.msk [vmem:[#allocation2 + $0x50] sm:$0xff] %vm256, %v345
        %v348 = vld [vmem:[%s258] sm:$0xff]
        %v349 = vld [vmem:[#allocation6 + $0x1] sm:$0x1]
        %v350 = vperm.slane %v349, 0
        %352 = vrot.lane.b32.xlu0 %v350, 10
        %v353 = vpop.permute.xlu0 %352
        %v355 = vmul.f32 %v348, %v353
        %357 = vrot.lane.b32.xlu0 %v355, 118
        %v358 = vpop.permute.xlu0 %357
        %360 = vst.msk [vmem:[#allocation2 + $0x58] sm:$0xff] %vm256, %v358
        %v361 = vld [vmem:[%s284] sm:$0xff]
        %v362 = vld [vmem:[#allocation6] sm:$0x1]
        %v363 = vperm.slane %v362, 0
        %365 = vrot.lane.b32.xlu0 %v363, 16
        %v366 = vpop.permute.xlu0 %365
        %v368 = vmul.f32 %v361, %v366
        %370 = vrot.lane.b32.xlu0 %v368, 112
        %v371 = vpop.permute.xlu0 %370
        %373 = vst.msk [vmem:[#allocation2 + $0x60] sm:$0xff] %vm256, %v371
        %v374 = vld [vmem:[%s220] sm:$0xff]
        %376 = vrot.lane.b32.xlu0 %v374, 111
        %v377 = vpop.permute.xlu0 %376
        %379 = vst.msk [vmem:[#allocation2 + $0x68] sm:$0xff] %vm256, %v377
        %v380 = vld [vmem:[%s284] sm:$0xff]
        %382 = vrot.lane.b32.xlu0 %v380, 111
        %v383 = vpop.permute.xlu0 %382
        %385 = vst.msk [vmem:[#allocation2 + $0x70] sm:$0xff] %vm256, %v383
        %v386 = vld [vmem:[%s220] sm:$0xff]
        %v387 = vld [vmem:[#allocation6 + $0x1] sm:$0x1]
        %v388 = vperm.slane %v387, 0
        %390 = vrot.lane.b32.xlu0 %v388, 18
        %v391 = vpop.permute.xlu0 %390
        %v393 = vmul.f32 %v386, %v391
        %395 = vrot.lane.b32.xlu0 %v393, 110
        %v396 = vpop.permute.xlu0 %395
        %398 = vst.msk [vmem:[#allocation2 + $0x78] sm:$0xff] %vm256, %v396
        %v399 = vld [vmem:[%s1] sm:$0xff]
        %v400 = vld [vmem:[#allocation2] sm:$0xff]
        %v401 = vld [vmem:[#allocation2 + $0x8] sm:$0xff]
        %v402 = vld [vmem:[#allocation2 + $0x10] sm:$0xff]
        %v403 = vld [vmem:[#allocation2 + $0x18] sm:$0xff]
        %v404 = vld [vmem:[#allocation2 + $0x20] sm:$0xff]
        %v405 = vld [vmem:[#allocation2 + $0x28] sm:$0xff]
        %v406 = vld [vmem:[#allocation2 + $0x30] sm:$0xff]
        %v407 = vld [vmem:[#allocation2 + $0x38] sm:$0xff]
        %v408 = vld [vmem:[#allocation2 + $0x40] sm:$0xff]
        %v409 = vld [vmem:[#allocation2 + $0x48] sm:$0xff]
        %v410 = vld [vmem:[#allocation2 + $0x50] sm:$0xff]
        %v411 = vld [vmem:[#allocation2 + $0x58] sm:$0xff]
        %v412 = vld [vmem:[#allocation2 + $0x60] sm:$0xff]
        %v413 = vld [vmem:[#allocation2 + $0x68] sm:$0xff]
        %v414 = vld [vmem:[#allocation2 + $0x70] sm:$0xff]
        %v415 = vld [vmem:[#allocation2 + $0x78] sm:$0xff]
        %v416 = vld [vmem:[%s2] sm:$0xff]
        %418 = vset.pattern.permute.xlu0 0
        %419 = vperm.xlu0 %418, %v416
        %v420 = vpop.permute.xlu0 %419
        %422 = vmatpush.msra.mxu0 %v415
        %423 = vmatpush.msra.mxu0 %v414
        %424 = vmatpush.msra.mxu0 %v413
        %425 = vmatpush.msra.mxu0 %v412
        %426 = vmatpush.msra.mxu0 %v411
        %427 = vmatpush.msra.mxu0 %v410
        %428 = vmatpush.msra.mxu0 %v409
        %429 = vmatpush.msra.mxu0 %v408
        %430 = vmatpush.msra.mxu0 %v407
        %431 = vmatpush.msra.mxu0 %v406
        %432 = vmatpush.msra.mxu0 %v405
        %433 = vmatpush.msra.mxu0 %v404
        %434 = vmatpush.msra.mxu0 %v403
        %435 = vmatpush.msra.mxu0 %v402
        %436 = vmatpush.msra.mxu0 %v401
        %437 = vmatpush.msra.mxu0 %v400
        %438 = vmatmul.f32.gmra.mxu0 %v399
        %v439 = vpop.f32.mrf.mxu0
        %v440 = vadd.f32 %v420, %v439
        %441 = vdwg.mxu0
        %442 = vst.msk [vmem:[%s250] sm:$0xff] %vm256, %v440
        %s443 = sand.u32 %s135, 1
        %s444 = scalar_lea.sflag [#allocation5], %s443
        %s445 = sand.u32 %s135, 1
        %s446 = smul.addr %s445, 8
        %s447 = scalar_lea.vmem [#allocation8], %s446
        // Predicated region
        $region45: #{tpu_custom_call.1} parent=35 // pred_check
          %p448 = pneg %p145
        $region46: #{tpu_custom_call.1} parent=35 // pred_check_branch
          %450 = sbr.rel (%p448) target = $region48
        $region47: #{tpu_custom_call.1} parent=35 // pred_region
          %452 = vsyncadd %s444, 0
          %s453 = sadd.s32 %s27, %s26
          %s454 = smul.addr %s453, 8
          %s455 = scalar_lea.hbm %s4, %s454
          %s457 = sshll.u32 %s447, 4
          %s458 = int_to_ptr.vmem [resolvable:$true] %s457
          %s459 = sshll.u32 %s455, 4
          %s460 = int_to_ptr.hbm [resolvable:$true] %s459
          %462 = dma.vmem_to_hbm [thread:$0]  %s458, 128, %s460, %s444
        $region48: #{tpu_custom_call.1} parent=35 // pred_fallthru
          _
      $region36: #{tpu_custom_call.1} parent=5 // pred_fallthru
        _
      %p463 = scmp.le.s32.totalorder 2, %s17
      // Predicated region
      $region49: #{tpu_custom_call.1} parent=5 // pred_check
        %p464 = pneg %p463
      $region50: #{tpu_custom_call.1} parent=5 // pred_check_branch
        %466 = sbr.rel (%p464) target = $region52
      $region51: #{tpu_custom_call.1} parent=5 // pred_region
        %s467 = ssub.s32 %s17, 2
        // Predicated region
        $region53: #{tpu_custom_call.1} parent=51 // pred_check
          %p468 = pneg %p151
        $region54: #{tpu_custom_call.1} parent=51 // pred_check_branch
          %470 = sbr.rel (%p468) target = $region56
        $region55: #{tpu_custom_call.1} parent=51 // pred_region
          %s471 = sand.u32 %s136, 1
          %s472 = scalar_lea.sflag [#allocation5], %s471
          %s473 = sand.u32 %s136, 1
          %s474 = smul.addr %s473, 8
          %s475 = scalar_lea.vmem [#allocation8], %s474
          %477 = dma.done %s472, 128
        $region56: #{tpu_custom_call.1} parent=51 // pred_fallthru
          _
      $region52: #{tpu_custom_call.1} parent=5 // pred_fallthru
        _
    $region6: #{tpu_custom_call.1} parent=1 // loop_footer
      %s21 = sadd.s32 1, %s17
    $region7: #{tpu_custom_call.1} parent=1 // loop_footer_branch
      %16 = sbr.rel target = $region3
    $region8: #{tpu_custom_call.1} parent=1 // loop_exit
      _
    %478 = vsyncpa [#allocation4], 1
    %s479 = scalar_lea.sflag [#allocation4], 1
    %480 = vsyncpa %s479, 1
    %481 = vsyncpa [#allocation7], 1
    %482 = vsyncpa [#allocation5], 1
    %s483 = scalar_lea.sflag [#allocation5], 1
    %484 = vsyncpa %s483, 1

</llo_original>
